<compile_context>
chip_gen: v5e
topology: v5e:2x2
jax: 0.10.0
libtpu: 0.0.40
codegen_flags: <defaults>
</compile_context>

<pallas_src>
import jax
import jax.numpy as jnp
from jax.experimental import pallas as pl
from jax.experimental.pallas import tpu as pltpu

HIDDEN = 128


def _round_up(x, m):
    return (x + m - 1) // m * m


def dqn_kernel(x_ref, w1_ref, w2_ref, w3_ref, b_ref, o_ref):
    # Fully fused 3-layer MLP on one batch tile. Weights/biases are VMEM
    # resident across grid steps; only x / o stream per tile.
    out_dim = o_ref.shape[-1]
    x = x_ref[...]
    h1 = jnp.dot(x, w1_ref[...], preferred_element_type=jnp.float32) + b_ref[0:1, :]
    h1 = jnp.maximum(h1, 0.0)
    h2 = jnp.dot(h1, w2_ref[...], preferred_element_type=jnp.float32) + b_ref[1:2, :]
    h2 = jnp.maximum(h2, 0.0)
    o_ref[...] = (
        jnp.dot(h2, w3_ref[...], preferred_element_type=jnp.float32)
        + b_ref[2:3, :out_dim]
    )


def dqn_forward(x, params, block_m=256):
    """Fused DQN forward. x: (B, input_dim) f32. Returns (B, output_dim) f32."""
    w1, b1, w2, b2, w3, b3 = params
    B, in_dim = x.shape
    hidden = w1.shape[1]
    out_dim = w3.shape[1]

    # Batch tile: multiple of 256 fills the wide MXU on v6e/v7x; clamp for tiny
    # batches (still a multiple of 8 sublanes). Pad B up to a multiple of BM.
    bm = min(block_m, _round_up(B, 8))
    b_pad = _round_up(B, bm)
    if b_pad != B:
        x = jnp.pad(x, ((0, b_pad - B), (0, 0)))

    # Pack the three biases into one (3, hidden) operand (b3 lane-padded with
    # zeros) -> 5 DMA operands instead of 7.
    bias_packed = jnp.zeros((3, hidden), jnp.float32)
    bias_packed = bias_packed.at[0, :].set(b1.reshape(-1))
    bias_packed = bias_packed.at[1, :].set(b2.reshape(-1))
    bias_packed = bias_packed.at[2, :out_dim].set(b3.reshape(-1))

    grid = (b_pad // bm,)
    # Constant block index -> operand stays resident in VMEM across the grid.
    resident = lambda shape: pl.BlockSpec(shape, lambda i: tuple(0 for _ in shape))

    # VMEM footprint per step: resident weights ~70 KiB + double-buffered
    # (bm, in_dim)/(bm, out_dim) tiles (~10 KiB at bm=256) -- far under the
    # 32 MiB default scoped limit on every generation, so no vmem_limit needed.
    out = pl.pallas_call(
        dqn_kernel,
        out_shape=jax.ShapeDtypeStruct((b_pad, out_dim), jnp.float32),
        grid=grid,
        in_specs=[
            pl.BlockSpec((bm, in_dim), lambda i: (i, 0)),   # streamed per tile
            resident(w1.shape),
            resident(w2.shape),
            resident(w3.shape),
            resident(bias_packed.shape),
        ],
        # out_dim=3 forces masked stores; output writeback is negligible at
        # these shapes, so we keep the native lane width (see perf review).
        out_specs=pl.BlockSpec((bm, out_dim), lambda i: (i, 0)),
        compiler_params=pltpu.CompilerParams(
            dimension_semantics=("parallel",),  # shard batch tiles across TCs (v7x)
        ),
    )(x, w1, w2, w3, bias_packed)
    return out[:B]


def init_params(key, input_dim, output_dim, hidden=HIDDEN):
    # Kaiming-normal (fan_in, relu): std = sqrt(2 / fan_in), matching
    # nn.init.kaiming_normal_(m.weight, mode='fan_in', nonlinearity='relu').
    k1, k2, k3, kb1, kb2, kb3 = jax.random.split(key, 6)

    def kaiming(k, fan_in, fan_out):
        std = jnp.sqrt(2.0 / fan_in)
        # stored as (fan_in, fan_out) so the kernel computes x @ W
        return jax.random.normal(k, (fan_in, fan_out), jnp.float32) * std

    def bias(k, fan_in, fan_out):
        # PyTorch default Linear bias init: U(-1/sqrt(fan_in), 1/sqrt(fan_in))
        bound = 1.0 / jnp.sqrt(jnp.float32(fan_in))
        return jax.random.uniform(k, (1, fan_out), jnp.float32, -bound, bound)

    w1 = kaiming(k1, input_dim, hidden)
    b1 = bias(kb1, input_dim, hidden)
    w2 = kaiming(k2, hidden, hidden)
    b2 = bias(kb2, hidden, hidden)
    w3 = kaiming(k3, hidden, output_dim)
    b3 = bias(kb3, hidden, output_dim)
    return (w1, b1, w2, b2, w3, b3)


def dqn_reference(x, params):
    w1, b1, w2, b2, w3, b3 = params
    h1 = jnp.maximum(x @ w1 + b1, 0.0)
    h2 = jnp.maximum(h1 @ w2 + b2, 0.0)
    return h2 @ w3 + b3


if __name__ == "__main__":
    # MountainCar-v0: observation dim = 2, action dim = 3.
    input_dim, output_dim = 2, 3

    key = jax.random.PRNGKey(0)
    kx1, kx2, kp = jax.random.split(key, 3)
    params = init_params(kp, input_dim, output_dim)

    # Small inference-style batch (single tile, grid=(1,)).
    x_small = jax.random.normal(kx1, (8, input_dim), jnp.float32)
    out_small = jax.block_until_ready(dqn_forward(x_small, params))
    ref_small = dqn_reference(x_small, params)
    assert out_small.shape == (8, output_dim)
    assert jnp.allclose(out_small, ref_small, atol=1e-5, rtol=1e-5)

    # Larger, non-multiple batch: exercises batch tiling (BM=256, grid=(2,))
    # and the padding/slicing path.
    x_big = jax.random.normal(kx2, (300, input_dim), jnp.float32)
    out_big = jax.block_until_ready(dqn_forward(x_big, params))
    ref_big = dqn_reference(x_big, params)
    assert out_big.shape == (300, output_dim)
    assert jnp.allclose(out_big, ref_big, atol=1e-5, rtol=1e-5)

    print("KERNEL_OK")
</pallas_src>

<mosaic_0001>
module attributes {stable_mosaic.version = 11 : i64} {
  func.func @dqn_kernel(%arg0: i32, %arg1: memref<8x2xf32, #tpu.memory_space<vmem>>, %arg2: memref<2x128xf32, #tpu.memory_space<vmem>>, %arg3: memref<128x128xf32, #tpu.memory_space<vmem>>, %arg4: memref<128x3xf32, #tpu.memory_space<vmem>>, %arg5: memref<3x128xf32, #tpu.memory_space<vmem>>, %arg6: memref<8x3xf32, #tpu.memory_space<vmem>>) attributes {dimension_semantics = [#tpu.dimension_semantics<parallel>], iteration_bounds = array<i64: 1>, scalar_prefetch = 0 : i64, scratch_operands = 0 : i64, tpu.core_type = #tpu.core_type<tc>, window_params = [{transform_indices = @transform_0, window_bounds = array<i64: 8, 2>}, {pipeline_mode = #tpu.pipeline_mode<synchronous>, transform_indices = @transform_1, window_bounds = array<i64: 2, 128>}, {pipeline_mode = #tpu.pipeline_mode<synchronous>, transform_indices = @transform_2, window_bounds = array<i64: 128, 128>}, {pipeline_mode = #tpu.pipeline_mode<synchronous>, transform_indices = @transform_3, window_bounds = array<i64: 128, 3>}, {pipeline_mode = #tpu.pipeline_mode<synchronous>, transform_indices = @transform_4, window_bounds = array<i64: 3, 128>}, {transform_indices = @transform_5, window_bounds = array<i64: 8, 3>}]} {
    %c0 = arith.constant 0 : index
    %c0_0 = arith.constant 0 : index
    %0 = vector.load %arg1[%c0, %c0_0] : memref<8x2xf32, #tpu.memory_space<vmem>>, vector<8x2xf32>
    %c0_1 = arith.constant 0 : index
    %c0_2 = arith.constant 0 : index
    %1 = vector.load %arg2[%c0_1, %c0_2] : memref<2x128xf32, #tpu.memory_space<vmem>>, vector<2x128xf32>
    %cst = arith.constant dense<0.000000e+00> : vector<8x128xf32>
    %2 = tpu.matmul %0, %1, %cst {dimension_numbers = #tpu.dot_dimension_numbers<[1], [0], [0], [1], [0, 0, 1, 1], [], []>} : vector<8x2xf32>, vector<2x128xf32>, vector<8x128xf32> -> vector<8x128xf32>
    %c0_3 = arith.constant 0 : index
    %c0_4 = arith.constant 0 : index
    %3 = vector.load %arg5[%c0_3, %c0_4] : memref<3x128xf32, #tpu.memory_space<vmem>>, vector<1x128xf32>
    %4 = vector.broadcast %3 : vector<1x128xf32> to vector<8x128xf32>
    %5 = arith.addf %2, %4 : vector<8x128xf32>
    %cst_5 = arith.constant 0.000000e+00 : f32
    %6 = vector.broadcast %cst_5 : f32 to vector<8x128xf32>
    %7 = arith.maximumf %5, %6 : vector<8x128xf32>
    %c0_6 = arith.constant 0 : index
    %c0_7 = arith.constant 0 : index
    %8 = vector.load %arg3[%c0_6, %c0_7] : memref<128x128xf32, #tpu.memory_space<vmem>>, vector<128x128xf32>
    %cst_8 = arith.constant dense<0.000000e+00> : vector<8x128xf32>
    %9 = tpu.matmul %7, %8, %cst_8 {dimension_numbers = #tpu.dot_dimension_numbers<[1], [0], [0], [1], [0, 0, 1, 1], [], []>} : vector<8x128xf32>, vector<128x128xf32>, vector<8x128xf32> -> vector<8x128xf32>
    %c1 = arith.constant 1 : index
    %c0_9 = arith.constant 0 : index
    %10 = vector.load %arg5[%c1, %c0_9] : memref<3x128xf32, #tpu.memory_space<vmem>>, vector<1x128xf32>
    %11 = vector.broadcast %10 : vector<1x128xf32> to vector<8x128xf32>
    %12 = arith.addf %9, %11 : vector<8x128xf32>
    %cst_10 = arith.constant 0.000000e+00 : f32
    %13 = vector.broadcast %cst_10 : f32 to vector<8x128xf32>
    %14 = arith.maximumf %12, %13 : vector<8x128xf32>
    %c0_11 = arith.constant 0 : index
    %c0_12 = arith.constant 0 : index
    %15 = vector.load %arg4[%c0_11, %c0_12] : memref<128x3xf32, #tpu.memory_space<vmem>>, vector<128x3xf32>
    %cst_13 = arith.constant dense<0.000000e+00> : vector<8x3xf32>
    %16 = tpu.matmul %14, %15, %cst_13 {dimension_numbers = #tpu.dot_dimension_numbers<[1], [0], [0], [1], [0, 0, 1, 1], [], []>} : vector<8x128xf32>, vector<128x3xf32>, vector<8x3xf32> -> vector<8x3xf32>
    %c2 = arith.constant 2 : index
    %c0_14 = arith.constant 0 : index
    %17 = vector.load %arg5[%c2, %c0_14] : memref<3x128xf32, #tpu.memory_space<vmem>>, vector<1x3xf32>
    %18 = vector.broadcast %17 : vector<1x3xf32> to vector<8x3xf32>
    %19 = arith.addf %16, %18 : vector<8x3xf32>
    %c0_15 = arith.constant 0 : index
    %c0_16 = arith.constant 0 : index
    %20 = vector.load %arg6[%c0_15, %c0_16] : memref<8x3xf32, #tpu.memory_space<vmem>>, vector<8x3xf32>
    tpu.vector_store %arg6[%c0_15, %c0_16], %19 {strides = array<i32>} : memref<8x3xf32, #tpu.memory_space<vmem>>, vector<8x3xf32>,
    return
  }
  func.func @transform_0(%arg0: i32) -> (i32, i32) {
    %c0_i32 = arith.constant 0 : i32
    %c0_i32_0 = arith.constant 0 : i32
    return %arg0, %c0_i32 : i32, i32
  }
  func.func @transform_1(%arg0: i32) -> (i32, i32) {
    %c0_i32 = arith.constant 0 : i32
    %c0_i32_0 = arith.constant 0 : i32
    %c0_i32_1 = arith.constant 0 : i32
    return %c0_i32, %c0_i32_0 : i32, i32
  }
  func.func @transform_2(%arg0: i32) -> (i32, i32) {
    %c0_i32 = arith.constant 0 : i32
    %c0_i32_0 = arith.constant 0 : i32
    %c0_i32_1 = arith.constant 0 : i32
    return %c0_i32, %c0_i32_0 : i32, i32
  }
  func.func @transform_3(%arg0: i32) -> (i32, i32) {
    %c0_i32 = arith.constant 0 : i32
    %c0_i32_0 = arith.constant 0 : i32
    %c0_i32_1 = arith.constant 0 : i32
    return %c0_i32, %c0_i32_0 : i32, i32
  }
  func.func @transform_4(%arg0: i32) -> (i32, i32) {
    %c0_i32 = arith.constant 0 : i32
    %c0_i32_0 = arith.constant 0 : i32
    %c0_i32_1 = arith.constant 0 : i32
    return %c0_i32, %c0_i32_0 : i32, i32
  }
  func.func @transform_5(%arg0: i32) -> (i32, i32) {
    %c0_i32 = arith.constant 0 : i32
    %c0_i32_0 = arith.constant 0 : i32
    return %arg0, %c0_i32 : i32, i32
  }
}

</mosaic_0001>

<llo_original>
// kernel: tpu_custom_call.1
$region0: #{tpu_custom_call.1}
  #allocation0 [shape = 'u32[]', space=smem, size = 0x4, offset = 0x4, fixed_abs, tag = 'smem constant byte address 0x4 - core index']
  #allocation1 [shape = 'u32[72,128]{1,0:T(1,128)}', space=vmem, size = 0x9000, scoped, tag = 'internal scratch']
  %s0 = inlined_call_operand.vmem [shape: f32[8,2], index: 0, kind: input, shape index: {}]
  %s1 = inlined_call_operand.vmem [shape: f32[2,128], index: 1, kind: input, shape index: {}]
  %s2 = inlined_call_operand.vmem [shape: f32[128,128], index: 2, kind: input, shape index: {}]
  %s3 = inlined_call_operand.vmem [shape: f32[128,3], index: 3, kind: input, shape index: {}]
  %s4 = inlined_call_operand.vmem [shape: f32[3,128], index: 4, kind: input, shape index: {}]
  %s5 = inlined_call_operand.vmem [shape: f32[8,3], index: 5, kind: output, shape index: {}]
  %s6 = sld [smem:[#allocation0]]
  $region30: #{tpu_custom_call.1} parent=0
    _
  %s8 = ssub.s32 1, %s6
  %s9 = scalar_select 0, %s8, %s6
  // Predicated region
  $region2: #{tpu_custom_call.1} parent=0 // pred_check
    _
  $region3: #{tpu_custom_call.1} parent=0 // pred_check_branch
    %11 = sbr.rel (0) target = $region5
  $region4: #{tpu_custom_call.1} parent=0 // pred_region
    _
  $region5: #{tpu_custom_call.1} parent=0 // pred_fallthru
    _
  // Predicated region
  $region6: #{tpu_custom_call.1} parent=0 // pred_check
    _
  $region7: #{tpu_custom_call.1} parent=0 // pred_check_branch
    %13 = sbr.rel (0) target = $region9
  $region8: #{tpu_custom_call.1} parent=0 // pred_region
    _
  $region9: #{tpu_custom_call.1} parent=0 // pred_fallthru
    _
  // Predicated region
  $region10: #{tpu_custom_call.1} parent=0 // pred_check
    _
  $region11: #{tpu_custom_call.1} parent=0 // pred_check_branch
    %15 = sbr.rel (0) target = $region13
  $region12: #{tpu_custom_call.1} parent=0 // pred_region
    _
  $region13: #{tpu_custom_call.1} parent=0 // pred_fallthru
    _
  // Predicated region
  $region14: #{tpu_custom_call.1} parent=0 // pred_check
    _
  $region15: #{tpu_custom_call.1} parent=0 // pred_check_branch
    %17 = sbr.rel (0) target = $region17
  $region16: #{tpu_custom_call.1} parent=0 // pred_region
    _
  $region17: #{tpu_custom_call.1} parent=0 // pred_fallthru
    _
  // Predicated region
  $region18: #{tpu_custom_call.1} parent=0 // pred_check
    _
  $region19: #{tpu_custom_call.1} parent=0 // pred_check_branch
    %19 = sbr.rel (0) target = $region21
  $region20: #{tpu_custom_call.1} parent=0 // pred_region
    _
  $region21: #{tpu_custom_call.1} parent=0 // pred_fallthru
    _
  %v20 = vld [vmem:[%s0] sm:$0xff]
  %v21 = vld [vmem:[%s1] sm:$0x3]
  %v22 = vld [vmem:[%s4] sm:$0x1]
  %v23 = vperm.slane %v22, 0
  %vm24 = vcmask 15360
  %v26 = vsel %vm24, %v20, 0
  %vm28 = vcmask 1041408
  %v30 = vsel %vm28, %v21, 0
  %32 = vmatpush.msra.mxu0 0.0
  %33 = vmatpush.msra.mxu0 0.0
  %34 = vmatpush.msra.mxu0 0.0
  %35 = vmatpush.msra.mxu0 0.0
  %36 = vmatpush.msra.mxu0 0.0
  %37 = vmatpush.msra.mxu0 0.0
  %38 = vmatpush.msra.mxu0 0.0
  %39 = vmatpush.msra.mxu0 0.0
  %40 = vmatpush.msra.mxu0 0.0
  %41 = vmatpush.msra.mxu0 0.0
  %42 = vmatpush.msra.mxu0 0.0
  %43 = vmatpush.msra.mxu0 0.0
  %44 = vmatpush.msra.mxu0 0.0
  %45 = vmatpush.msra.mxu0 0.0
  %46 = vmatpush.msra.mxu0 0.0
  %47 = vmatpush.msra.mxu0 %v30
  %48 = vmatmul.f32.gmra.mxu0 %v26
  %v49 = vpop.f32.mrf.mxu0
  %v50 = vadd.f32 %v23, %v49
  %51 = vdwg.mxu0
  %v52 = vmax.f32 %v50, 0.0
  %v53 = vld [vmem:[%s2] sm:$0xff]
  %v54 = vld [vmem:[%s2 + $0x8] sm:$0xff]
  %v55 = vld [vmem:[%s2 + $0x10] sm:$0xff]
  %v56 = vld [vmem:[%s2 + $0x18] sm:$0xff]
  %v57 = vld [vmem:[%s2 + $0x20] sm:$0xff]
  %v58 = vld [vmem:[%s2 + $0x28] sm:$0xff]
  %v59 = vld [vmem:[%s2 + $0x30] sm:$0xff]
  %v60 = vld [vmem:[%s2 + $0x38] sm:$0xff]
  %v61 = vld [vmem:[%s2 + $0x40] sm:$0xff]
  %v62 = vld [vmem:[%s2 + $0x48] sm:$0xff]
  %v63 = vld [vmem:[%s2 + $0x50] sm:$0xff]
  %v64 = vld [vmem:[%s2 + $0x58] sm:$0xff]
  %v65 = vld [vmem:[%s2 + $0x60] sm:$0xff]
  %v66 = vld [vmem:[%s2 + $0x68] sm:$0xff]
  %v67 = vld [vmem:[%s2 + $0x70] sm:$0xff]
  %v68 = vld [vmem:[%s2 + $0x78] sm:$0xff]
  %v69 = vld [vmem:[%s4 + $0x1] sm:$0x1]
  %v70 = vperm.slane %v69, 0
  %71 = vmatpush.msra.mxu0 %v68
  %72 = vmatpush.msra.mxu0 %v67
  %73 = vmatpush.msra.mxu0 %v66
  %74 = vmatpush.msra.mxu0 %v65
  %75 = vmatpush.msra.mxu0 %v64
  %76 = vmatpush.msra.mxu0 %v63
  %77 = vmatpush.msra.mxu0 %v62
  %78 = vmatpush.msra.mxu0 %v61
  %79 = vmatpush.msra.mxu0 %v60
  %80 = vmatpush.msra.mxu0 %v59
  %81 = vmatpush.msra.mxu0 %v58
  %82 = vmatpush.msra.mxu0 %v57
  %83 = vmatpush.msra.mxu0 %v56
  %84 = vmatpush.msra.mxu0 %v55
  %85 = vmatpush.msra.mxu0 %v54
  %86 = vmatpush.msra.mxu0 %v53
  %87 = vmatmul.f32.gmra.mxu0 %v52
  %v88 = vpop.f32.mrf.mxu0
  %v89 = vadd.f32 %v70, %v88
  %90 = vdwg.mxu0
  %v91 = vmax.f32 %v89, 0.0
  %v92 = vld [vmem:[%s3] sm:$0xff]
  %v93 = vld [vmem:[%s3 + $0x8] sm:$0xff]
  %v94 = vld [vmem:[%s3 + $0x10] sm:$0xff]
  %v95 = vld [vmem:[%s3 + $0x18] sm:$0xff]
  %v96 = vld [vmem:[%s3 + $0x20] sm:$0xff]
  %v97 = vld [vmem:[%s3 + $0x28] sm:$0xff]
  %v98 = vld [vmem:[%s3 + $0x30] sm:$0xff]
  %v99 = vld [vmem:[%s3 + $0x38] sm:$0xff]
  %v100 = vld [vmem:[%s3 + $0x40] sm:$0xff]
  %v101 = vld [vmem:[%s3 + $0x48] sm:$0xff]
  %v102 = vld [vmem:[%s3 + $0x50] sm:$0xff]
  %v103 = vld [vmem:[%s3 + $0x58] sm:$0xff]
  %v104 = vld [vmem:[%s3 + $0x60] sm:$0xff]
  %v105 = vld [vmem:[%s3 + $0x68] sm:$0xff]
  %v106 = vld [vmem:[%s3 + $0x70] sm:$0xff]
  %v107 = vld [vmem:[%s3 + $0x78] sm:$0xff]
  %v108 = vld [vmem:[%s4 + $0x2] sm:$0x1]
  %v109 = vperm.slane %v108, 0
  %110 = vmatpush.msra.mxu0 %v107
  %111 = vmatpush.msra.mxu0 %v106
  %112 = vmatpush.msra.mxu0 %v105
  %113 = vmatpush.msra.mxu0 %v104
  %114 = vmatpush.msra.mxu0 %v103
  %115 = vmatpush.msra.mxu0 %v102
  %116 = vmatpush.msra.mxu0 %v101
  %117 = vmatpush.msra.mxu0 %v100
  %118 = vmatpush.msra.mxu0 %v99
  %119 = vmatpush.msra.mxu0 %v98
  %120 = vmatpush.msra.mxu0 %v97
  %121 = vmatpush.msra.mxu0 %v96
  %122 = vmatpush.msra.mxu0 %v95
  %123 = vmatpush.msra.mxu0 %v94
  %124 = vmatpush.msra.mxu0 %v93
  %125 = vmatpush.msra.mxu0 %v92
  %126 = vmatmul.f32.gmra.mxu0 %v91
  %v127 = vpop.f32.mrf.mxu0
  %v128 = vadd.f32 %v109, %v127
  %129 = vdwg.mxu0
  %vm130 = vcmask 23552
  %131 = vst.msk [vmem:[%s5] sm:$0xff] %vm130, %v128
  // Predicated region
  $region22: #{tpu_custom_call.1} parent=0 // pred_check
    _
  $region23: #{tpu_custom_call.1} parent=0 // pred_check_branch
    %133 = sbr.rel (0) target = $region25
  $region24: #{tpu_custom_call.1} parent=0 // pred_region
    _
  $region25: #{tpu_custom_call.1} parent=0 // pred_fallthru
    _
  // Predicated region
  $region26: #{tpu_custom_call.1} parent=0 // pred_check
    _
  $region27: #{tpu_custom_call.1} parent=0 // pred_check_branch
    %135 = sbr.rel (0) target = $region29
  $region28: #{tpu_custom_call.1} parent=0 // pred_region
    _
  $region29: #{tpu_custom_call.1} parent=0 // pred_fallthru
    _

</llo_original>
